<compile_context>
chip_gen: v7x
topology: tpu7x:2x2x1
jax: 0.10.0
libtpu: 0.0.40
codegen_flags: <defaults>
</compile_context>

<pallas_src>
import functools

import jax
import jax.numpy as jnp
from jax.experimental import pallas as pl
from jax.experimental.pallas import tpu as pltpu

KERNEL = 3  # depthwise kernel size (module default)
PAD = 1     # padding (module default)


def _pick_b_tile(N, C, Cout, sub=8):
    """Smallest batch-fold factor b | N with b*C and b*Cout multiples of 8.

    Smallest such b keeps the grid as long as possible (v7x megacore work);
    if none exists, fall back to a single full-array step (always legal).
    """
    for b in range(1, N + 1):
        if N % b == 0 and (b * C) % sub == 0 and (b * Cout) % sub == 0:
            return b
    return N


# ----------------------- fused depthwise + pointwise kernel -----------------
def _fused_dwconv_kernel(x_ref, masks_ref, dw_w_ref, dw_b_ref, pw_w_ref,
                         pw_b_ref, out_ref, *, B_tile, C, Cout, HW, W,
                         use_mxu):
    # x_ref   : (B_tile*C,    HW)   VMEM  -- folded batch+channel, lane-dense
    # masks_ref:(K*K,         HW)   VMEM  -- precomputed 0/1 halo masks
    # dw_w_ref: (B_tile*C,   K*K)   VMEM  -- depthwise taps (tiled over batch)
    # dw_b_ref: (B_tile*C,     1)   VMEM  -- depthwise bias (tiled over batch)
    # pw_w_ref: (Cout,         C)   VMEM  -- pointwise 1x1 weights
    # pw_b_ref: (Cout,         1)   VMEM  -- pointwise bias
    # out_ref : (B_tile*Cout, HW)   VMEM
    x2 = x_ref[...].astype(jnp.float32)              # (B*C, HW), lane-dense
    masks = masks_ref[...]                           # (K*K, HW) 0/1 f32
    dw_w = dw_w_ref[...]                             # (B*C, K*K)
    dw_b = dw_b_ref[...]                             # (B*C, 1)
    pw_w = pw_w_ref[...]                             # (Cout, C)
    pw_b = pw_b_ref[...]                             # (Cout, 1)

    # ---- depthwise 3x3: XLU lane-roll + precomputed halo mask + VPU FMA ----
    dw_acc = jnp.zeros_like(x2)
    for di in range(KERNEL):
        for dj in range(KERNEL):
            t = di * KERNEL + dj
            off = (di - PAD) * W + (dj - PAD)        # flat source-pixel offset
            if off == 0:
                shifted = x2
            else:
                # shifted[:, f] = x2[:, (f + off) % HW]; wrap is masked below.
                shifted = pltpu.roll(x2, shift=(-off) % HW, axis=1)
            dw_acc = dw_acc + dw_w[:, t:t + 1] * (shifted * masks[t:t + 1, :])
    dw_acc = dw_acc + dw_b                           # depthwise bias
    # depthwise Dropout2d -> identity (inference)

    # ---- pointwise 1x1, per folded batch element ----
    for b in range(B_tile):
        blk = dw_acc[b * C:(b + 1) * C, :]           # (C, HW)
        if use_mxu:
            # Only for large channel counts (C, Cout >= 64): MXU matmul.
            acc_b = jnp.dot(pw_w, blk, preferred_element_type=jnp.float32)
        else:
            # C rank-1 broadcast FMAs on the VPU (no MXU push/pop latency).
            acc_b = jnp.zeros((Cout, HW), jnp.float32)
            for c in range(C):
                acc_b = acc_b + pw_w[:, c:c + 1] * blk[c:c + 1, :]
        acc_b = acc_b + pw_b                         # pointwise bias
        # pointwise Dropout2d -> identity (inference)
        out_ref[b * Cout:(b + 1) * Cout, :] = acc_b.astype(out_ref.dtype)


# ------------------------------ wrapper --------------------------------------
def dwconv_forward(x, dw_w, dw_b, pw_w, pw_b):
    """x: (N, C, H, W) f32; dw_w: (C,1,K,K); dw_b: (C,); pw_w: (Cout,C,1,1); pw_b: (Cout,)"""
    N, C, H, W = x.shape
    Cout = pw_b.shape[0]
    K = KERNEL
    HW = H * W

    B_tile = _pick_b_tile(N, C, Cout)
    G = N // B_tile

    # Trailing-dim reshapes only (no transposes, no padded copies).
    x_flat = x.reshape(N * C, HW).astype(jnp.float32)

    # Precompute the 9 zero-padding halo masks once (constant across the grid).
    rows = jnp.arange(HW, dtype=jnp.int32) // W
    cols = jnp.arange(HW, dtype=jnp.int32) % W
    mask_list = []
    for di in range(K):
        oy = di - PAD
        for dj in range(K):
            ox = dj - PAD
            m = ((rows + oy >= 0) & (rows + oy < H) &
                 (cols + ox >= 0) & (cols + ox < W))
            mask_list.append(m)
    masks = jnp.stack(mask_list, axis=0).astype(jnp.float32)      # (K*K, HW)

    # Depthwise params tiled over the folded batch so the kernel indexes
    # (B_tile*C, .) directly (tiny: 8x9 / 8x1 here).
    dw_w2 = jnp.tile(dw_w.reshape(C, K * K).astype(jnp.float32), (B_tile, 1))
    dw_b2 = jnp.tile(dw_b.reshape(C, 1).astype(jnp.float32), (B_tile, 1))
    pw_w2 = pw_w.reshape(Cout, C).astype(jnp.float32)
    pw_b2 = pw_b.reshape(Cout, 1).astype(jnp.float32)

    use_mxu = (C >= 64 and Cout >= 64)

    kernel_fn = functools.partial(_fused_dwconv_kernel, B_tile=B_tile, C=C,
                                  Cout=Cout, HW=HW, W=W, use_mxu=use_mxu)

    out_flat = pl.pallas_call(
        kernel_fn,
        out_shape=jax.ShapeDtypeStruct((N * Cout, HW), jnp.float32),
        grid=(G,),
        in_specs=[
            pl.BlockSpec((B_tile * C, HW), lambda n: (n, 0)),
            pl.BlockSpec((K * K, HW), lambda n: (0, 0)),
            pl.BlockSpec((B_tile * C, K * K), lambda n: (0, 0)),
            pl.BlockSpec((B_tile * C, 1), lambda n: (0, 0)),
            pl.BlockSpec((Cout, C), lambda n: (0, 0)),
            pl.BlockSpec((Cout, 1), lambda n: (0, 0)),
        ],
        out_specs=pl.BlockSpec((B_tile * Cout, HW), lambda n: (n, 0)),
        compiler_params=pltpu.CompilerParams(
            dimension_semantics=("parallel",)),
    )(x_flat, masks, dw_w2, dw_b2, pw_w2, pw_b2)

    return out_flat.reshape(N, Cout, H, W)


# ----------------------- pure-JAX reference (for check) ----------------------
def dwconv_reference(x, dw_w, dw_b, pw_w, pw_b):
    N, C, H, W = x.shape
    Cout = pw_w.shape[0]
    dw = jax.lax.conv_general_dilated(
        x, dw_w, window_strides=(1, 1), padding=((PAD, PAD), (PAD, PAD)),
        dimension_numbers=("NCHW", "OIHW", "NCHW"), feature_group_count=C)
    dw = dw + dw_b.reshape(1, C, 1, 1)
    pw = jax.lax.conv_general_dilated(
        dw, pw_w, window_strides=(1, 1), padding="VALID",
        dimension_numbers=("NCHW", "OIHW", "NCHW"))
    return pw + pw_b.reshape(1, Cout, 1, 1)


if __name__ == "__main__":
    # Small shapes consistent with the module: nin=4, nout=8, batch=2, 16x16.
    N, nin, nout, H, W = 2, 4, 8, 16, 16

    key = jax.random.PRNGKey(0)
    k1, k2, k3, k4, k5 = jax.random.split(key, 5)

    # Deterministic PyTorch-Conv2d-like uniform init.
    a_dw = 1.0 / (1 * KERNEL * KERNEL) ** 0.5
    a_pw = 1.0 / (nin * 1 * 1) ** 0.5
    dw_w = jax.random.uniform(k1, (nin, 1, KERNEL, KERNEL), jnp.float32, -a_dw, a_dw)
    dw_b = jax.random.uniform(k2, (nin,), jnp.float32, -a_dw, a_dw)
    pw_w = jax.random.uniform(k3, (nout, nin, 1, 1), jnp.float32, -a_pw, a_pw)
    pw_b = jax.random.uniform(k4, (nout,), jnp.float32, -a_pw, a_pw)

    x = jax.random.normal(k5, (N, nin, H, W), jnp.float32)

    out = dwconv_forward(x, dw_w, dw_b, pw_w, pw_b)
    out = jax.block_until_ready(out)

    ref = jax.block_until_ready(dwconv_reference(x, dw_w, dw_b, pw_w, pw_b))
    assert out.shape == (N, nout, H, W), out.shape
    assert jnp.allclose(out, ref, atol=1e-4, rtol=1e-4), float(jnp.max(jnp.abs(out - ref)))

    print("KERNEL_OK")
</pallas_src>

<mosaic_0001>
module attributes {stable_mosaic.version = 11 : i64} {
  func.func @_fused_dwconv_kernel(%arg0: i32, %arg1: memref<8x256xf32, #tpu.memory_space<vmem>>, %arg2: memref<9x256xf32, #tpu.memory_space<vmem>>, %arg3: memref<8x9xf32, #tpu.memory_space<vmem>>, %arg4: memref<8x1xf32, #tpu.memory_space<vmem>>, %arg5: memref<8x4xf32, #tpu.memory_space<vmem>>, %arg6: memref<8x1xf32, #tpu.memory_space<vmem>>, %arg7: memref<16x256xf32, #tpu.memory_space<vmem>>) attributes {dimension_semantics = [#tpu.dimension_semantics<parallel>], iteration_bounds = array<i64: 1>, scalar_prefetch = 0 : i64, scratch_operands = 0 : i64, tpu.core_type = #tpu.core_type<tc>, window_params = [{transform_indices = @transform_0, window_bounds = array<i64: 8, 256>}, {pipeline_mode = #tpu.pipeline_mode<synchronous>, transform_indices = @transform_1, window_bounds = array<i64: 9, 256>}, {pipeline_mode = #tpu.pipeline_mode<synchronous>, transform_indices = @transform_2, window_bounds = array<i64: 8, 9>}, {pipeline_mode = #tpu.pipeline_mode<synchronous>, transform_indices = @transform_3, window_bounds = array<i64: 8, 1>}, {pipeline_mode = #tpu.pipeline_mode<synchronous>, transform_indices = @transform_4, window_bounds = array<i64: 8, 4>}, {pipeline_mode = #tpu.pipeline_mode<synchronous>, transform_indices = @transform_5, window_bounds = array<i64: 8, 1>}, {transform_indices = @transform_6, window_bounds = array<i64: 16, 256>}]} {
    %c0 = arith.constant 0 : index
    %c0_0 = arith.constant 0 : index
    %0 = vector.load %arg1[%c0, %c0_0] : memref<8x256xf32, #tpu.memory_space<vmem>>, vector<8x256xf32>
    %c0_1 = arith.constant 0 : index
    %c0_2 = arith.constant 0 : index
    %1 = vector.load %arg2[%c0_1, %c0_2] : memref<9x256xf32, #tpu.memory_space<vmem>>, vector<9x256xf32>
    %c0_3 = arith.constant 0 : index
    %c0_4 = arith.constant 0 : index
    %2 = vector.load %arg3[%c0_3, %c0_4] : memref<8x9xf32, #tpu.memory_space<vmem>>, vector<8x9xf32>
    %c0_5 = arith.constant 0 : index
    %c0_6 = arith.constant 0 : index
    %3 = vector.load %arg4[%c0_5, %c0_6] : memref<8x1xf32, #tpu.memory_space<vmem>>, vector<8x1xf32>
    %c0_7 = arith.constant 0 : index
    %c0_8 = arith.constant 0 : index
    %4 = vector.load %arg5[%c0_7, %c0_8] : memref<8x4xf32, #tpu.memory_space<vmem>>, vector<8x4xf32>
    %c0_9 = arith.constant 0 : index
    %c0_10 = arith.constant 0 : index
    %5 = vector.load %arg6[%c0_9, %c0_10] : memref<8x1xf32, #tpu.memory_space<vmem>>, vector<8x1xf32>
    %cst = arith.constant 0.000000e+00 : f32
    %6 = vector.broadcast %cst : f32 to vector<8x256xf32>
    %c17_i32 = arith.constant 17 : i32
    %7 = tpu.dynamic_rotate %0 by %c17_i32 dim 1 : vector<8x256xf32>, i32 -> vector<8x256xf32>
    %8 = vector.extract_strided_slice %2 {offsets = [0, 0], sizes = [8, 1], strides = [1, 1]} : vector<8x9xf32> to vector<8x1xf32>
    %9 = vector.extract_strided_slice %1 {offsets = [0, 0], sizes = [1, 256], strides = [1, 1]} : vector<9x256xf32> to vector<1x256xf32>
    %10 = vector.broadcast %9 : vector<1x256xf32> to vector<8x256xf32>
    %11 = arith.mulf %7, %10 : vector<8x256xf32>
    %12 = vector.broadcast %8 : vector<8x1xf32> to vector<8x256xf32>
    %13 = arith.mulf %12, %11 : vector<8x256xf32>
    %14 = arith.addf %6, %13 : vector<8x256xf32>
    %c16_i32 = arith.constant 16 : i32
    %15 = tpu.dynamic_rotate %0 by %c16_i32 dim 1 : vector<8x256xf32>, i32 -> vector<8x256xf32>
    %16 = vector.extract_strided_slice %2 {offsets = [0, 1], sizes = [8, 1], strides = [1, 1]} : vector<8x9xf32> to vector<8x1xf32>
    %17 = vector.extract_strided_slice %1 {offsets = [1, 0], sizes = [1, 256], strides = [1, 1]} : vector<9x256xf32> to vector<1x256xf32>
    %18 = vector.broadcast %17 : vector<1x256xf32> to vector<8x256xf32>
    %19 = arith.mulf %15, %18 : vector<8x256xf32>
    %20 = vector.broadcast %16 : vector<8x1xf32> to vector<8x256xf32>
    %21 = arith.mulf %20, %19 : vector<8x256xf32>
    %22 = arith.addf %14, %21 : vector<8x256xf32>
    %c15_i32 = arith.constant 15 : i32
    %23 = tpu.dynamic_rotate %0 by %c15_i32 dim 1 : vector<8x256xf32>, i32 -> vector<8x256xf32>
    %24 = vector.extract_strided_slice %2 {offsets = [0, 2], sizes = [8, 1], strides = [1, 1]} : vector<8x9xf32> to vector<8x1xf32>
    %25 = vector.extract_strided_slice %1 {offsets = [2, 0], sizes = [1, 256], strides = [1, 1]} : vector<9x256xf32> to vector<1x256xf32>
    %26 = vector.broadcast %25 : vector<1x256xf32> to vector<8x256xf32>
    %27 = arith.mulf %23, %26 : vector<8x256xf32>
    %28 = vector.broadcast %24 : vector<8x1xf32> to vector<8x256xf32>
    %29 = arith.mulf %28, %27 : vector<8x256xf32>
    %30 = arith.addf %22, %29 : vector<8x256xf32>
    %c1_i32 = arith.constant 1 : i32
    %31 = tpu.dynamic_rotate %0 by %c1_i32 dim 1 : vector<8x256xf32>, i32 -> vector<8x256xf32>
    %32 = vector.extract_strided_slice %2 {offsets = [0, 3], sizes = [8, 1], strides = [1, 1]} : vector<8x9xf32> to vector<8x1xf32>
    %33 = vector.extract_strided_slice %1 {offsets = [3, 0], sizes = [1, 256], strides = [1, 1]} : vector<9x256xf32> to vector<1x256xf32>
    %34 = vector.broadcast %33 : vector<1x256xf32> to vector<8x256xf32>
    %35 = arith.mulf %31, %34 : vector<8x256xf32>
    %36 = vector.broadcast %32 : vector<8x1xf32> to vector<8x256xf32>
    %37 = arith.mulf %36, %35 : vector<8x256xf32>
    %38 = arith.addf %30, %37 : vector<8x256xf32>
    %39 = vector.extract_strided_slice %2 {offsets = [0, 4], sizes = [8, 1], strides = [1, 1]} : vector<8x9xf32> to vector<8x1xf32>
    %40 = vector.extract_strided_slice %1 {offsets = [4, 0], sizes = [1, 256], strides = [1, 1]} : vector<9x256xf32> to vector<1x256xf32>
    %41 = vector.broadcast %40 : vector<1x256xf32> to vector<8x256xf32>
    %42 = arith.mulf %0, %41 : vector<8x256xf32>
    %43 = vector.broadcast %39 : vector<8x1xf32> to vector<8x256xf32>
    %44 = arith.mulf %43, %42 : vector<8x256xf32>
    %45 = arith.addf %38, %44 : vector<8x256xf32>
    %c255_i32 = arith.constant 255 : i32
    %46 = tpu.dynamic_rotate %0 by %c255_i32 dim 1 : vector<8x256xf32>, i32 -> vector<8x256xf32>
    %47 = vector.extract_strided_slice %2 {offsets = [0, 5], sizes = [8, 1], strides = [1, 1]} : vector<8x9xf32> to vector<8x1xf32>
    %48 = vector.extract_strided_slice %1 {offsets = [5, 0], sizes = [1, 256], strides = [1, 1]} : vector<9x256xf32> to vector<1x256xf32>
    %49 = vector.broadcast %48 : vector<1x256xf32> to vector<8x256xf32>
    %50 = arith.mulf %46, %49 : vector<8x256xf32>
    %51 = vector.broadcast %47 : vector<8x1xf32> to vector<8x256xf32>
    %52 = arith.mulf %51, %50 : vector<8x256xf32>
    %53 = arith.addf %45, %52 : vector<8x256xf32>
    %c241_i32 = arith.constant 241 : i32
    %54 = tpu.dynamic_rotate %0 by %c241_i32 dim 1 : vector<8x256xf32>, i32 -> vector<8x256xf32>
    %55 = vector.extract_strided_slice %2 {offsets = [0, 6], sizes = [8, 1], strides = [1, 1]} : vector<8x9xf32> to vector<8x1xf32>
    %56 = vector.extract_strided_slice %1 {offsets = [6, 0], sizes = [1, 256], strides = [1, 1]} : vector<9x256xf32> to vector<1x256xf32>
    %57 = vector.broadcast %56 : vector<1x256xf32> to vector<8x256xf32>
    %58 = arith.mulf %54, %57 : vector<8x256xf32>
    %59 = vector.broadcast %55 : vector<8x1xf32> to vector<8x256xf32>
    %60 = arith.mulf %59, %58 : vector<8x256xf32>
    %61 = arith.addf %53, %60 : vector<8x256xf32>
    %c240_i32 = arith.constant 240 : i32
    %62 = tpu.dynamic_rotate %0 by %c240_i32 dim 1 : vector<8x256xf32>, i32 -> vector<8x256xf32>
    %63 = vector.extract_strided_slice %2 {offsets = [0, 7], sizes = [8, 1], strides = [1, 1]} : vector<8x9xf32> to vector<8x1xf32>
    %64 = vector.extract_strided_slice %1 {offsets = [7, 0], sizes = [1, 256], strides = [1, 1]} : vector<9x256xf32> to vector<1x256xf32>
    %65 = vector.broadcast %64 : vector<1x256xf32> to vector<8x256xf32>
    %66 = arith.mulf %62, %65 : vector<8x256xf32>
    %67 = vector.broadcast %63 : vector<8x1xf32> to vector<8x256xf32>
    %68 = arith.mulf %67, %66 : vector<8x256xf32>
    %69 = arith.addf %61, %68 : vector<8x256xf32>
    %c239_i32 = arith.constant 239 : i32
    %70 = tpu.dynamic_rotate %0 by %c239_i32 dim 1 : vector<8x256xf32>, i32 -> vector<8x256xf32>
    %71 = vector.extract_strided_slice %2 {offsets = [0, 8], sizes = [8, 1], strides = [1, 1]} : vector<8x9xf32> to vector<8x1xf32>
    %72 = vector.extract_strided_slice %1 {offsets = [8, 0], sizes = [1, 256], strides = [1, 1]} : vector<9x256xf32> to vector<1x256xf32>
    %73 = vector.broadcast %72 : vector<1x256xf32> to vector<8x256xf32>
    %74 = arith.mulf %70, %73 : vector<8x256xf32>
    %75 = vector.broadcast %71 : vector<8x1xf32> to vector<8x256xf32>
    %76 = arith.mulf %75, %74 : vector<8x256xf32>
    %77 = arith.addf %69, %76 : vector<8x256xf32>
    %78 = vector.broadcast %3 : vector<8x1xf32> to vector<8x256xf32>
    %79 = arith.addf %77, %78 : vector<8x256xf32>
    %80 = vector.extract_strided_slice %79 {offsets = [0, 0], sizes = [4, 256], strides = [1, 1]} : vector<8x256xf32> to vector<4x256xf32>
    %cst_11 = arith.constant 0.000000e+00 : f32
    %81 = vector.broadcast %cst_11 : f32 to vector<8x256xf32>
    %82 = vector.extract_strided_slice %4 {offsets = [0, 0], sizes = [8, 1], strides = [1, 1]} : vector<8x4xf32> to vector<8x1xf32>
    %83 = vector.extract_strided_slice %80 {offsets = [0, 0], sizes = [1, 256], strides = [1, 1]} : vector<4x256xf32> to vector<1x256xf32>
    %84 = vector.broadcast %82 : vector<8x1xf32> to vector<8x256xf32>
    %85 = vector.broadcast %83 : vector<1x256xf32> to vector<8x256xf32>
    %86 = arith.mulf %84, %85 : vector<8x256xf32>
    %87 = arith.addf %81, %86 : vector<8x256xf32>
    %88 = vector.extract_strided_slice %4 {offsets = [0, 1], sizes = [8, 1], strides = [1, 1]} : vector<8x4xf32> to vector<8x1xf32>
    %89 = vector.extract_strided_slice %80 {offsets = [1, 0], sizes = [1, 256], strides = [1, 1]} : vector<4x256xf32> to vector<1x256xf32>
    %90 = vector.broadcast %88 : vector<8x1xf32> to vector<8x256xf32>
    %91 = vector.broadcast %89 : vector<1x256xf32> to vector<8x256xf32>
    %92 = arith.mulf %90, %91 : vector<8x256xf32>
    %93 = arith.addf %87, %92 : vector<8x256xf32>
    %94 = vector.extract_strided_slice %4 {offsets = [0, 2], sizes = [8, 1], strides = [1, 1]} : vector<8x4xf32> to vector<8x1xf32>
    %95 = vector.extract_strided_slice %80 {offsets = [2, 0], sizes = [1, 256], strides = [1, 1]} : vector<4x256xf32> to vector<1x256xf32>
    %96 = vector.broadcast %94 : vector<8x1xf32> to vector<8x256xf32>
    %97 = vector.broadcast %95 : vector<1x256xf32> to vector<8x256xf32>
    %98 = arith.mulf %96, %97 : vector<8x256xf32>
    %99 = arith.addf %93, %98 : vector<8x256xf32>
    %100 = vector.extract_strided_slice %4 {offsets = [0, 3], sizes = [8, 1], strides = [1, 1]} : vector<8x4xf32> to vector<8x1xf32>
    %101 = vector.extract_strided_slice %80 {offsets = [3, 0], sizes = [1, 256], strides = [1, 1]} : vector<4x256xf32> to vector<1x256xf32>
    %102 = vector.broadcast %100 : vector<8x1xf32> to vector<8x256xf32>
    %103 = vector.broadcast %101 : vector<1x256xf32> to vector<8x256xf32>
    %104 = arith.mulf %102, %103 : vector<8x256xf32>
    %105 = arith.addf %99, %104 : vector<8x256xf32>
    %106 = vector.broadcast %5 : vector<8x1xf32> to vector<8x256xf32>
    %107 = arith.addf %105, %106 : vector<8x256xf32>
    %c0_12 = arith.constant 0 : index
    %c0_13 = arith.constant 0 : index
    %108 = vector.load %arg7[%c0_12, %c0_13] : memref<16x256xf32, #tpu.memory_space<vmem>>, vector<8x256xf32>
    tpu.vector_store %arg7[%c0_12, %c0_13], %107 {strides = array<i32>} : memref<16x256xf32, #tpu.memory_space<vmem>>, vector<8x256xf32>,
    %109 = vector.extract_strided_slice %79 {offsets = [4, 0], sizes = [4, 256], strides = [1, 1]} : vector<8x256xf32> to vector<4x256xf32>
    %cst_14 = arith.constant 0.000000e+00 : f32
    %110 = vector.broadcast %cst_14 : f32 to vector<8x256xf32>
    %111 = vector.extract_strided_slice %4 {offsets = [0, 0], sizes = [8, 1], strides = [1, 1]} : vector<8x4xf32> to vector<8x1xf32>
    %112 = vector.extract_strided_slice %109 {offsets = [0, 0], sizes = [1, 256], strides = [1, 1]} : vector<4x256xf32> to vector<1x256xf32>
    %113 = vector.broadcast %111 : vector<8x1xf32> to vector<8x256xf32>
    %114 = vector.broadcast %112 : vector<1x256xf32> to vector<8x256xf32>
    %115 = arith.mulf %113, %114 : vector<8x256xf32>
    %116 = arith.addf %110, %115 : vector<8x256xf32>
    %117 = vector.extract_strided_slice %4 {offsets = [0, 1], sizes = [8, 1], strides = [1, 1]} : vector<8x4xf32> to vector<8x1xf32>
    %118 = vector.extract_strided_slice %109 {offsets = [1, 0], sizes = [1, 256], strides = [1, 1]} : vector<4x256xf32> to vector<1x256xf32>
    %119 = vector.broadcast %117 : vector<8x1xf32> to vector<8x256xf32>
    %120 = vector.broadcast %118 : vector<1x256xf32> to vector<8x256xf32>
    %121 = arith.mulf %119, %120 : vector<8x256xf32>
    %122 = arith.addf %116, %121 : vector<8x256xf32>
    %123 = vector.extract_strided_slice %4 {offsets = [0, 2], sizes = [8, 1], strides = [1, 1]} : vector<8x4xf32> to vector<8x1xf32>
    %124 = vector.extract_strided_slice %109 {offsets = [2, 0], sizes = [1, 256], strides = [1, 1]} : vector<4x256xf32> to vector<1x256xf32>
    %125 = vector.broadcast %123 : vector<8x1xf32> to vector<8x256xf32>
    %126 = vector.broadcast %124 : vector<1x256xf32> to vector<8x256xf32>
    %127 = arith.mulf %125, %126 : vector<8x256xf32>
    %128 = arith.addf %122, %127 : vector<8x256xf32>
    %129 = vector.extract_strided_slice %4 {offsets = [0, 3], sizes = [8, 1], strides = [1, 1]} : vector<8x4xf32> to vector<8x1xf32>
    %130 = vector.extract_strided_slice %109 {offsets = [3, 0], sizes = [1, 256], strides = [1, 1]} : vector<4x256xf32> to vector<1x256xf32>
    %131 = vector.broadcast %129 : vector<8x1xf32> to vector<8x256xf32>
    %132 = vector.broadcast %130 : vector<1x256xf32> to vector<8x256xf32>
    %133 = arith.mulf %131, %132 : vector<8x256xf32>
    %134 = arith.addf %128, %133 : vector<8x256xf32>
    %135 = vector.broadcast %5 : vector<8x1xf32> to vector<8x256xf32>
    %136 = arith.addf %134, %135 : vector<8x256xf32>
    %c8 = arith.constant 8 : index
    %c0_15 = arith.constant 0 : index
    %137 = vector.load %arg7[%c8, %c0_15] : memref<16x256xf32, #tpu.memory_space<vmem>>, vector<8x256xf32>
    tpu.vector_store %arg7[%c8, %c0_15], %136 {strides = array<i32>} : memref<16x256xf32, #tpu.memory_space<vmem>>, vector<8x256xf32>,
    return
  }
  func.func @transform_0(%arg0: i32) -> (i32, i32) {
    %c0_i32 = arith.constant 0 : i32
    %c0_i32_0 = arith.constant 0 : i32
    return %arg0, %c0_i32 : i32, i32
  }
  func.func @transform_1(%arg0: i32) -> (i32, i32) {
    %c0_i32 = arith.constant 0 : i32
    %c0_i32_0 = arith.constant 0 : i32
    %c0_i32_1 = arith.constant 0 : i32
    return %c0_i32, %c0_i32_0 : i32, i32
  }
  func.func @transform_2(%arg0: i32) -> (i32, i32) {
    %c0_i32 = arith.constant 0 : i32
    %c0_i32_0 = arith.constant 0 : i32
    %c0_i32_1 = arith.constant 0 : i32
    return %c0_i32, %c0_i32_0 : i32, i32
  }
  func.func @transform_3(%arg0: i32) -> (i32, i32) {
    %c0_i32 = arith.constant 0 : i32
    %c0_i32_0 = arith.constant 0 : i32
    %c0_i32_1 = arith.constant 0 : i32
    return %c0_i32, %c0_i32_0 : i32, i32
  }
  func.func @transform_4(%arg0: i32) -> (i32, i32) {
    %c0_i32 = arith.constant 0 : i32
    %c0_i32_0 = arith.constant 0 : i32
    %c0_i32_1 = arith.constant 0 : i32
    return %c0_i32, %c0_i32_0 : i32, i32
  }
  func.func @transform_5(%arg0: i32) -> (i32, i32) {
    %c0_i32 = arith.constant 0 : i32
    %c0_i32_0 = arith.constant 0 : i32
    %c0_i32_1 = arith.constant 0 : i32
    return %c0_i32, %c0_i32_0 : i32, i32
  }
  func.func @transform_6(%arg0: i32) -> (i32, i32) {
    %c0_i32 = arith.constant 0 : i32
    %c0_i32_0 = arith.constant 0 : i32
    return %arg0, %c0_i32 : i32, i32
  }
}

</mosaic_0001>

<llo_original>
// kernel: tpu_custom_call.1
$region0: #{tpu_custom_call.1}
  #allocation0 [shape = 'u32[]', space=smem, size = 0x4, offset = 0x4, fixed_abs, tag = 'smem constant byte address 0x4 - core index']
  #allocation1 [shape = 'u32[144,128]{1,0:T(1,128)}', space=vmem, size = 0x12000, scoped, tag = 'internal scratch']
  %s0 = inlined_call_operand.hbm [shape: f32[8,256], index: 0, kind: input, shape index: {}]
  %s1 = inlined_call_operand.vmem [shape: f32[9,256], index: 1, kind: input, shape index: {}]
  %s2 = inlined_call_operand.hbm [shape: f32[8,9], index: 2, kind: input, shape index: {}]
  %s3 = inlined_call_operand.vmem [shape: f32[8,1], index: 3, kind: input, shape index: {}]
  %s4 = inlined_call_operand.vmem [shape: f32[8,4], index: 4, kind: input, shape index: {}]
  %s5 = inlined_call_operand.vmem [shape: f32[8,1], index: 5, kind: input, shape index: {}]
  %s6 = inlined_call_operand.hbm [shape: f32[16,256], index: 6, kind: output, shape index: {}]
  %s7 = sld [smem:[#allocation0]]
  $region42: #{tpu_custom_call.1} parent=0
    _
  %s9 = ssub.s32 1, %s7
  %s10 = scalar_select 0, %s9, %s7
  $region1: #{tpu_custom_call.1} parent=0
    #allocation2 [shape = 'u8[8192]{0}', space=vmem, size = 0x2000, scoped, tag = 'input window, operand 0, single buffered']
    #allocation3 [shape = 's32[1]{0}', space=sflag, size = 0x4, scoped, tag = 'scoped memory for tpu_custom_call.1']
    #allocation4 [shape = 's32[1]{0}', space=sflag, size = 0x4, scoped, tag = 'scoped memory for tpu_custom_call.1']
    #allocation5 [shape = 'u8[4096]{0}', space=vmem, size = 0x1000, scoped, tag = 'input window, operand 2, single buffered']
    #allocation6 [shape = 's32[1]{0}', space=sflag, size = 0x4, scoped, tag = 'scoped memory for tpu_custom_call.1']
    #allocation7 [shape = 'u8[16384]{0}', space=vmem, size = 0x4000, scoped, tag = 'output window, operand 0, single buffered']
    %11 = vsyncpa [#allocation3], 0
    %12 = vsyncpa [#allocation6], 0
    %13 = vsyncpa [#allocation4], 0
    // Predicated region
    $region2: #{tpu_custom_call.1} parent=1 // pred_check
      _
    $region3: #{tpu_custom_call.1} parent=1 // pred_check_branch
      %15 = sbr.rel (0) target = $region5
    $region4: #{tpu_custom_call.1} parent=1 // pred_region
      %s17 = ssub.s32 256, 256
      %18 = vsyncadd [#allocation3], %s17
      %s20 = sshll.u32 [#allocation2], 4
      %s21 = int_to_ptr.vmem [resolvable:$true] %s20
      %23 = dma.hbm_to_vmem [thread:$0]  %s0, 256, %s21, [#allocation3]
    $region5: #{tpu_custom_call.1} parent=1 // pred_fallthru
      _
    // Predicated region
    $region6: #{tpu_custom_call.1} parent=1 // pred_check
      _
    $region7: #{tpu_custom_call.1} parent=1 // pred_check_branch
      %25 = sbr.rel (0) target = $region9
    $region8: #{tpu_custom_call.1} parent=1 // pred_region
      _
    $region9: #{tpu_custom_call.1} parent=1 // pred_fallthru
      _
    // Predicated region
    $region10: #{tpu_custom_call.1} parent=1 // pred_check
      _
    $region11: #{tpu_custom_call.1} parent=1 // pred_check_branch
      %27 = sbr.rel (0) target = $region13
    $region12: #{tpu_custom_call.1} parent=1 // pred_region
      %s29 = ssub.s32 128, 128
      %30 = vsyncadd [#allocation6], %s29
      %s32 = sshll.u32 [#allocation5], 4
      %s33 = int_to_ptr.vmem [resolvable:$true] %s32
      %35 = dma.hbm_to_vmem [thread:$0]  %s2, 128, %s33, [#allocation6]
    $region13: #{tpu_custom_call.1} parent=1 // pred_fallthru
      _
    // Predicated region
    $region14: #{tpu_custom_call.1} parent=1 // pred_check
      _
    $region15: #{tpu_custom_call.1} parent=1 // pred_check_branch
      %37 = sbr.rel (0) target = $region17
    $region16: #{tpu_custom_call.1} parent=1 // pred_region
      _
    $region17: #{tpu_custom_call.1} parent=1 // pred_fallthru
      _
    // Predicated region
    $region18: #{tpu_custom_call.1} parent=1 // pred_check
      _
    $region19: #{tpu_custom_call.1} parent=1 // pred_check_branch
      %39 = sbr.rel (0) target = $region21
    $region20: #{tpu_custom_call.1} parent=1 // pred_region
      _
    $region21: #{tpu_custom_call.1} parent=1 // pred_fallthru
      _
    // Predicated region
    $region22: #{tpu_custom_call.1} parent=1 // pred_check
      _
    $region23: #{tpu_custom_call.1} parent=1 // pred_check_branch
      %41 = sbr.rel (0) target = $region25
    $region24: #{tpu_custom_call.1} parent=1 // pred_region
      _
    $region25: #{tpu_custom_call.1} parent=1 // pred_fallthru
      _
    // Predicated region
    $region26: #{tpu_custom_call.1} parent=1 // pred_check
      _
    $region27: #{tpu_custom_call.1} parent=1 // pred_check_branch
      %43 = sbr.rel (0) target = $region29
    $region28: #{tpu_custom_call.1} parent=1 // pred_region
      %44 = dma.done [#allocation3], 256
    $region29: #{tpu_custom_call.1} parent=1 // pred_fallthru
      _
    // Predicated region
    $region30: #{tpu_custom_call.1} parent=1 // pred_check
      _
    $region31: #{tpu_custom_call.1} parent=1 // pred_check_branch
      %46 = sbr.rel (0) target = $region33
    $region32: #{tpu_custom_call.1} parent=1 // pred_region
      %47 = dma.done [#allocation6], 128
    $region33: #{tpu_custom_call.1} parent=1 // pred_fallthru
      _
    %v48 = vld [vmem:[#allocation2] sm:$0xff]
    %v49 = vld [vmem:[#allocation2 + $0x8] sm:$0xff]
    %v50 = vld [vmem:[%s1] sm:$0xff]
    %v51 = vld [vmem:[%s1 + $0x8] sm:$0xff]
    %v52 = vld [vmem:[%s1 + $0x10] sm:$0x1]
    %v53 = vld [vmem:[%s1 + $0x18] sm:$0x1]
    %v54 = vld [vmem:[#allocation5] sm:$0xff]
    %v55 = vld [vmem:[%s3] sm:$0xff]
    %v56 = vld [vmem:[%s4] sm:$0xff]
    %v57 = vld [vmem:[%s5] sm:$0xff]
    %58 = vrot.lane.b32.xlu0 %v48, 17
    %v59 = vpop.permute.xlu0 %58
    %60 = vrot.lane.b32.xlu0 %v49, 17
    %v61 = vpop.permute.xlu0 %60
    %v62 = vlaneseq
    %v63 = vand.u32 %v62, 127
    %vm64 = vcmp.lt.s32.totalorder %v63, 17
    %v65 = vsel %vm64, %v59, %v61
    %v66 = vsel %vm64, %v61, %v59
    %v67 = vlaneseq
    %v68 = vshrl.u32 %v67, 7
    %v69 = vsub.s32 0, %v68
    %v70 = vrot.slane %v50, %v69
    %v71 = vlaneseq
    %v72 = vshrl.u32 %v71, 7
    %v73 = vsub.s32 0, %v72
    %v74 = vrot.slane %v51, %v73
    %v75 = vmul.f32 %v66, %v70
    %v76 = vmul.f32 %v65, %v74
    %78 = vset.pattern.permute.xlu0 0
    %79 = vperm.xlu0 %78, %v54
    %v80 = vpop.permute.xlu0 %79
    %v82 = vmul.f32 %v80, %v75
    %v83 = vmul.f32 %v80, %v76
    %v84 = vadd.f32 %v82, 0.0
    %v85 = vadd.f32 %v83, 0.0
    %86 = vrot.lane.b32.xlu0 %v48, 16
    %v87 = vpop.permute.xlu0 %86
    %88 = vrot.lane.b32.xlu0 %v49, 16
    %v89 = vpop.permute.xlu0 %88
    %vm90 = vcmp.lt.s32.totalorder %v63, 16
    %v91 = vsel %vm90, %v87, %v89
    %v92 = vsel %vm90, %v89, %v87
    %v93 = vlaneseq
    %v94 = vshrl.u32 %v93, 7
    %v95 = vsub.s32 1, %v94
    %v96 = vrot.slane %v50, %v95
    %v97 = vlaneseq
    %v98 = vshrl.u32 %v97, 7
    %v99 = vsub.s32 1, %v98
    %v100 = vrot.slane %v51, %v99
    %v101 = vmul.f32 %v92, %v96
    %v102 = vmul.f32 %v91, %v100
    %103 = vset.pattern.permute.xlu0 1
    %104 = vperm.xlu0 %103, %v54
    %v105 = vpop.permute.xlu0 %104
    %v107 = vmul.f32 %v105, %v101
    %v108 = vmul.f32 %v105, %v102
    %v109 = vadd.f32 %v84, %v107
    %v110 = vadd.f32 %v85, %v108
    %111 = vrot.lane.b32.xlu0 %v48, 15
    %v112 = vpop.permute.xlu0 %111
    %113 = vrot.lane.b32.xlu0 %v49, 15
    %v114 = vpop.permute.xlu0 %113
    %vm115 = vcmp.lt.s32.totalorder %v63, 15
    %v116 = vsel %vm115, %v112, %v114
    %v117 = vsel %vm115, %v114, %v112
    %v118 = vlaneseq
    %v119 = vshrl.u32 %v118, 7
    %v120 = vsub.s32 2, %v119
    %v121 = vrot.slane %v50, %v120
    %v122 = vlaneseq
    %v123 = vshrl.u32 %v122, 7
    %v124 = vsub.s32 2, %v123
    %v125 = vrot.slane %v51, %v124
    %v126 = vmul.f32 %v117, %v121
    %v127 = vmul.f32 %v116, %v125
    %128 = vset.pattern.permute.xlu0 2
    %129 = vperm.xlu0 %128, %v54
    %v130 = vpop.permute.xlu0 %129
    %v132 = vmul.f32 %v130, %v126
    %v133 = vmul.f32 %v130, %v127
    %v134 = vadd.f32 %v109, %v132
    %v135 = vadd.f32 %v110, %v133
    %136 = vrot.lane.b32.xlu0 %v48, 1
    %v137 = vpop.permute.xlu0 %136
    %138 = vrot.lane.b32.xlu0 %v49, 1
    %v139 = vpop.permute.xlu0 %138
    %vm140 = vcmp.lt.s32.totalorder %v63, 1
    %v141 = vsel %vm140, %v137, %v139
    %v142 = vsel %vm140, %v139, %v137
    %v143 = vlaneseq
    %v144 = vshrl.u32 %v143, 7
    %v145 = vsub.s32 3, %v144
    %v146 = vrot.slane %v50, %v145
    %v147 = vlaneseq
    %v148 = vshrl.u32 %v147, 7
    %v149 = vsub.s32 3, %v148
    %v150 = vrot.slane %v51, %v149
    %v151 = vmul.f32 %v142, %v146
    %v152 = vmul.f32 %v141, %v150
    %153 = vset.pattern.permute.xlu0 3
    %154 = vperm.xlu0 %153, %v54
    %v155 = vpop.permute.xlu0 %154
    %v157 = vmul.f32 %v155, %v151
    %v158 = vmul.f32 %v155, %v152
    %v159 = vadd.f32 %v134, %v157
    %v160 = vadd.f32 %v135, %v158
    %v161 = vlaneseq
    %v162 = vshrl.u32 %v161, 7
    %v163 = vsub.s32 4, %v162
    %v164 = vrot.slane %v50, %v163
    %v165 = vlaneseq
    %v166 = vshrl.u32 %v165, 7
    %v167 = vsub.s32 4, %v166
    %v168 = vrot.slane %v51, %v167
    %v169 = vmul.f32 %v48, %v164
    %v170 = vmul.f32 %v49, %v168
    %171 = vset.pattern.permute.xlu0 4
    %172 = vperm.xlu0 %171, %v54
    %v173 = vpop.permute.xlu0 %172
    %v175 = vmul.f32 %v173, %v169
    %v176 = vmul.f32 %v173, %v170
    %v177 = vadd.f32 %v159, %v175
    %v178 = vadd.f32 %v160, %v176
    %179 = vrot.lane.b32.xlu0 %v48, 127
    %v180 = vpop.permute.xlu0 %179
    %181 = vrot.lane.b32.xlu0 %v49, 127
    %v182 = vpop.permute.xlu0 %181
    %vm183 = vcmp.lt.s32.totalorder %v63, 127
    %v184 = vsel %vm183, %v180, %v182
    %v185 = vsel %vm183, %v182, %v180
    %v186 = vlaneseq
    %v187 = vshrl.u32 %v186, 7
    %v188 = vsub.s32 5, %v187
    %v189 = vrot.slane %v50, %v188
    %v190 = vlaneseq
    %v191 = vshrl.u32 %v190, 7
    %v192 = vsub.s32 5, %v191
    %v193 = vrot.slane %v51, %v192
    %v194 = vmul.f32 %v184, %v189
    %v195 = vmul.f32 %v185, %v193
    %196 = vset.pattern.permute.xlu0 5
    %197 = vperm.xlu0 %196, %v54
    %v198 = vpop.permute.xlu0 %197
    %v200 = vmul.f32 %v198, %v194
    %v201 = vmul.f32 %v198, %v195
    %v202 = vadd.f32 %v177, %v200
    %v203 = vadd.f32 %v178, %v201
    %204 = vrot.lane.b32.xlu0 %v48, 113
    %v205 = vpop.permute.xlu0 %204
    %206 = vrot.lane.b32.xlu0 %v49, 113
    %v207 = vpop.permute.xlu0 %206
    %vm208 = vcmp.lt.s32.totalorder %v63, 113
    %v209 = vsel %vm208, %v205, %v207
    %v210 = vsel %vm208, %v207, %v205
    %v211 = vlaneseq
    %v212 = vshrl.u32 %v211, 7
    %v213 = vsub.s32 6, %v212
    %v214 = vrot.slane %v50, %v213
    %v215 = vlaneseq
    %v216 = vshrl.u32 %v215, 7
    %v217 = vsub.s32 6, %v216
    %v218 = vrot.slane %v51, %v217
    %v219 = vmul.f32 %v209, %v214
    %v220 = vmul.f32 %v210, %v218
    %221 = vset.pattern.permute.xlu0 6
    %222 = vperm.xlu0 %221, %v54
    %v223 = vpop.permute.xlu0 %222
    %v225 = vmul.f32 %v223, %v219
    %v226 = vmul.f32 %v223, %v220
    %v227 = vadd.f32 %v202, %v225
    %v228 = vadd.f32 %v203, %v226
    %229 = vrot.lane.b32.xlu0 %v48, 112
    %v230 = vpop.permute.xlu0 %229
    %231 = vrot.lane.b32.xlu0 %v49, 112
    %v232 = vpop.permute.xlu0 %231
    %vm233 = vcmp.lt.s32.totalorder %v63, 112
    %v234 = vsel %vm233, %v230, %v232
    %v235 = vsel %vm233, %v232, %v230
    %v236 = vlaneseq
    %v237 = vshrl.u32 %v236, 7
    %v238 = vsub.s32 7, %v237
    %v239 = vrot.slane %v50, %v238
    %v240 = vlaneseq
    %v241 = vshrl.u32 %v240, 7
    %v242 = vsub.s32 7, %v241
    %v243 = vrot.slane %v51, %v242
    %v244 = vmul.f32 %v234, %v239
    %v245 = vmul.f32 %v235, %v243
    %246 = vset.pattern.permute.xlu0 7
    %247 = vperm.xlu0 %246, %v54
    %v248 = vpop.permute.xlu0 %247
    %v250 = vmul.f32 %v248, %v244
    %v251 = vmul.f32 %v248, %v245
    %v252 = vadd.f32 %v227, %v250
    %v253 = vadd.f32 %v228, %v251
    %254 = vrot.lane.b32.xlu0 %v48, 111
    %v255 = vpop.permute.xlu0 %254
    %256 = vrot.lane.b32.xlu0 %v49, 111
    %v257 = vpop.permute.xlu0 %256
    %vm258 = vcmp.lt.s32.totalorder %v63, 111
    %v259 = vsel %vm258, %v255, %v257
    %v260 = vsel %vm258, %v257, %v255
    %v261 = vlaneseq
    %v262 = vshrl.u32 %v261, 7
    %v263 = vsub.s32 0, %v262
    %v264 = vrot.slane %v52, %v263
    %v265 = vlaneseq
    %v266 = vshrl.u32 %v265, 7
    %v267 = vsub.s32 0, %v266
    %v268 = vrot.slane %v53, %v267
    %v269 = vmul.f32 %v259, %v264
    %v270 = vmul.f32 %v260, %v268
    %271 = vset.pattern.permute.xlu0 8
    %272 = vperm.xlu0 %271, %v54
    %v273 = vpop.permute.xlu0 %272
    %v275 = vmul.f32 %v273, %v269
    %v276 = vmul.f32 %v273, %v270
    %v277 = vadd.f32 %v252, %v275
    %v278 = vadd.f32 %v253, %v276
    %280 = vset.pattern.permute.xlu0 0
    %281 = vperm.xlu0 %280, %v55
    %v282 = vpop.permute.xlu0 %281
    %v284 = vadd.f32 %v277, %v282
    %v285 = vadd.f32 %v278, %v282
    %287 = vset.pattern.permute.xlu0 0
    %288 = vperm.xlu0 %287, %v56
    %v289 = vpop.permute.xlu0 %288
    %v291 = vlaneseq
    %v292 = vshrl.u32 %v291, 7
    %v293 = vsub.s32 0, %v292
    %v294 = vrot.slane %v284, %v293
    %v295 = vlaneseq
    %v296 = vshrl.u32 %v295, 7
    %v297 = vsub.s32 0, %v296
    %v298 = vrot.slane %v285, %v297
    %v299 = vmul.f32 %v289, %v294
    %v300 = vmul.f32 %v289, %v298
    %v301 = vadd.f32 %v299, 0.0
    %v302 = vadd.f32 %v300, 0.0
    %303 = vset.pattern.permute.xlu0 1
    %304 = vperm.xlu0 %303, %v56
    %v305 = vpop.permute.xlu0 %304
    %v307 = vlaneseq
    %v308 = vshrl.u32 %v307, 7
    %v309 = vsub.s32 1, %v308
    %v310 = vrot.slane %v284, %v309
    %v311 = vlaneseq
    %v312 = vshrl.u32 %v311, 7
    %v313 = vsub.s32 1, %v312
    %v314 = vrot.slane %v285, %v313
    %v315 = vmul.f32 %v305, %v310
    %v316 = vmul.f32 %v305, %v314
    %v317 = vadd.f32 %v301, %v315
    %v318 = vadd.f32 %v302, %v316
    %319 = vset.pattern.permute.xlu0 2
    %320 = vperm.xlu0 %319, %v56
    %v321 = vpop.permute.xlu0 %320
    %v323 = vlaneseq
    %v324 = vshrl.u32 %v323, 7
    %v325 = vsub.s32 2, %v324
    %v326 = vrot.slane %v284, %v325
    %v327 = vlaneseq
    %v328 = vshrl.u32 %v327, 7
    %v329 = vsub.s32 2, %v328
    %v330 = vrot.slane %v285, %v329
    %v331 = vmul.f32 %v321, %v326
    %v332 = vmul.f32 %v321, %v330
    %v333 = vadd.f32 %v317, %v331
    %v334 = vadd.f32 %v318, %v332
    %335 = vset.pattern.permute.xlu0 3
    %336 = vperm.xlu0 %335, %v56
    %v337 = vpop.permute.xlu0 %336
    %v339 = vlaneseq
    %v340 = vshrl.u32 %v339, 7
    %v341 = vsub.s32 3, %v340
    %v342 = vrot.slane %v284, %v341
    %v343 = vlaneseq
    %v344 = vshrl.u32 %v343, 7
    %v345 = vsub.s32 3, %v344
    %v346 = vrot.slane %v285, %v345
    %v347 = vmul.f32 %v337, %v342
    %v348 = vmul.f32 %v337, %v346
    %v349 = vadd.f32 %v333, %v347
    %v350 = vadd.f32 %v334, %v348
    %352 = vset.pattern.permute.xlu0 0
    %353 = vperm.xlu0 %352, %v57
    %v354 = vpop.permute.xlu0 %353
    %v356 = vadd.f32 %v349, %v354
    %v357 = vadd.f32 %v350, %v354
    %358 = vst [vmem:[#allocation7] sm:$0xff] %v356
    %359 = vst [vmem:[#allocation7 + $0x8] sm:$0xff] %v357
    %v360 = vlaneseq
    %v361 = vshrl.u32 %v360, 7
    %v362 = vsub.s32 4, %v361
    %v363 = vrot.slane %v284, %v362
    %v364 = vlaneseq
    %v365 = vshrl.u32 %v364, 7
    %v366 = vsub.s32 4, %v365
    %v367 = vrot.slane %v285, %v366
    %v368 = vmul.f32 %v289, %v363
    %v369 = vmul.f32 %v289, %v367
    %v370 = vadd.f32 %v368, 0.0
    %v371 = vadd.f32 %v369, 0.0
    %v372 = vlaneseq
    %v373 = vshrl.u32 %v372, 7
    %v374 = vsub.s32 5, %v373
    %v375 = vrot.slane %v284, %v374
    %v376 = vlaneseq
    %v377 = vshrl.u32 %v376, 7
    %v378 = vsub.s32 5, %v377
    %v379 = vrot.slane %v285, %v378
    %v380 = vmul.f32 %v305, %v375
    %v381 = vmul.f32 %v305, %v379
    %v382 = vadd.f32 %v370, %v380
    %v383 = vadd.f32 %v371, %v381
    %v384 = vlaneseq
    %v385 = vshrl.u32 %v384, 7
    %v386 = vsub.s32 6, %v385
    %v387 = vrot.slane %v284, %v386
    %v388 = vlaneseq
    %v389 = vshrl.u32 %v388, 7
    %v390 = vsub.s32 6, %v389
    %v391 = vrot.slane %v285, %v390
    %v392 = vmul.f32 %v321, %v387
    %v393 = vmul.f32 %v321, %v391
    %v394 = vadd.f32 %v382, %v392
    %v395 = vadd.f32 %v383, %v393
    %v396 = vlaneseq
    %v397 = vshrl.u32 %v396, 7
    %v398 = vsub.s32 7, %v397
    %v399 = vrot.slane %v284, %v398
    %v400 = vlaneseq
    %v401 = vshrl.u32 %v400, 7
    %v402 = vsub.s32 7, %v401
    %v403 = vrot.slane %v285, %v402
    %v404 = vmul.f32 %v337, %v399
    %v405 = vmul.f32 %v337, %v403
    %v406 = vadd.f32 %v394, %v404
    %v407 = vadd.f32 %v395, %v405
    %v408 = vadd.f32 %v406, %v354
    %v409 = vadd.f32 %v407, %v354
    %410 = vst [vmem:[#allocation7 + $0x10] sm:$0xff] %v408
    %411 = vst [vmem:[#allocation7 + $0x18] sm:$0xff] %v409
    // Predicated region
    $region34: #{tpu_custom_call.1} parent=1 // pred_check
      _
    $region35: #{tpu_custom_call.1} parent=1 // pred_check_branch
      %413 = sbr.rel (0) target = $region37
    $region36: #{tpu_custom_call.1} parent=1 // pred_region
      %s415 = ssub.s32 512, 512
      %416 = vsyncadd [#allocation4], %s415
      %s417 = sshll.u32 [#allocation7], 4
      %s418 = int_to_ptr.vmem [resolvable:$true] %s417
      %423 = dma.vmem_to_hbm [thread:$0]  %s418, 512, %s6, [#allocation4], 256, 256, 16
    $region37: #{tpu_custom_call.1} parent=1 // pred_fallthru
      _
    // Predicated region
    $region38: #{tpu_custom_call.1} parent=1 // pred_check
      _
    $region39: #{tpu_custom_call.1} parent=1 // pred_check_branch
      %425 = sbr.rel (0) target = $region41
    $region40: #{tpu_custom_call.1} parent=1 // pred_region
      %426 = dma.done [#allocation4], 512
    $region41: #{tpu_custom_call.1} parent=1 // pred_fallthru
      _
    %427 = vsyncpa [#allocation3], 1
    %428 = vsyncpa [#allocation6], 1
    %429 = vsyncpa [#allocation4], 1

</llo_original>
